<compile_context>
chip_gen: v6e
topology: v6e:2x2x1
jax: 0.10.0
libtpu: 0.0.40
codegen_flags: <defaults>
</compile_context>

<pallas_src>
import jax
import jax.numpy as jnp
from jax.experimental import pallas as pl
from jax.experimental.pallas import tpu as pltpu


def _compose_conv_chain(conv_w, conv_b, t_in, filter_width, dilation):
    """Fold the 4 dilated ConvTranspose2d layers into one affine map along T.

    chain(x)[t, :] = sum_s M[t, s] * x[s, :] + beta[t]
    (each conv uses a single scalar weight per tap, shared across the lane dim,
    so the composition is exactly a (t4, T) matrix plus a per-position bias).
    """
    fw, dil = filter_width, dilation

    def tconv_matrix(tin, w):
        tout = tin + dil * (fw - 1)
        a = jnp.zeros((tout, tin), jnp.float32)
        eye = jnp.eye(tin, dtype=jnp.float32)
        for k in range(fw):                       # scatter form: out[i + dil*k] += w[k] * x[i]
            lo = dil * k
            a = a.at[lo:lo + tin, :].add(eye * w[k])
        return a

    m = jnp.eye(t_in, dtype=jnp.float32)
    beta = jnp.zeros((t_in,), jnp.float32)
    tin = t_in
    for i in range(4):
        a = tconv_matrix(tin, conv_w[i])
        m = a @ m
        beta = a @ beta + conv_b[i]
        tin = tin + dil * (fw - 1)
    return m, beta                                # (t4, T), (t4,)


def _kernel(x_ref, wt_ref, m_ref, bias_ref, o_ref):
    # Linear (bias-free), lane-padded:  (T, D) @ (D, Cp) -> (T, Cp)   [MXU]
    z = jnp.dot(x_ref[0], wt_ref[...], preferred_element_type=jnp.float32)
    # Composed transposed-conv chain + precomputed bias: (t4, T) @ (T, Cp) + (t4, Cp)  [MXU + VPU]
    o_ref[0] = jnp.dot(m_ref[...], z, preferred_element_type=jnp.float32) + bias_ref[...]


def reg_block_ncnn(x, conv_w, conv_b, lin_w, *, filter_width, dilation):
    """x: (B, T, D) float32; conv_w: (4, fw); conv_b: (4,); lin_w: (C, D) torch layout."""
    B, T, D = x.shape
    C = lin_w.shape[0]
    t4 = T + 4 * dilation * (filter_width - 1)
    Cp = max(128, -(-C // 128) * 128)             # lane-dense output width

    m, beta = _compose_conv_chain(conv_w.astype(jnp.float32),
                                  conv_b.astype(jnp.float32),
                                  T, filter_width, dilation)

    wt_pad = jnp.zeros((D, Cp), jnp.float32).at[:, :C].set(lin_w.T.astype(jnp.float32))
    # After the bias-free linear, the conv-chain bias contributes beta[t] * sum_d W[c, d].
    bias_out = beta[:, None] * jnp.sum(wt_pad, axis=0)[None, :]      # (t4, Cp)

    out = pl.pallas_call(
        _kernel,
        out_shape=jax.ShapeDtypeStruct((B, t4, Cp), jnp.float32),
        grid=(B,),
        in_specs=[
            pl.BlockSpec((1, T, D), lambda b: (b, 0, 0)),   # one batch row per step
            pl.BlockSpec((D, Cp), lambda b: (0, 0)),        # padded W^T (resident)
            pl.BlockSpec((t4, T), lambda b: (0, 0)),        # composed conv matrix (resident)
            pl.BlockSpec((t4, Cp), lambda b: (0, 0)),       # precomposed bias (resident)
        ],
        out_specs=pl.BlockSpec((1, t4, Cp), lambda b: (b, 0, 0)),
        compiler_params=pltpu.CompilerParams(
            dimension_semantics=("parallel",)),
    )(x.astype(jnp.float32), wt_pad, m, bias_out)
    return out[..., :C]


def reference(x, conv_w, conv_b, lin_w, *, filter_width, dilation):
    """Pure-JAX reference of the PyTorch forward (scatter form of ConvTranspose2d)."""
    out = x.astype(jnp.float32)
    for i in range(4):
        B, T, D = out.shape
        Tout = T + dilation * (filter_width - 1)
        acc = jnp.zeros((B, Tout, D), jnp.float32)
        for k in range(filter_width):
            lo = dilation * k
            acc = acc.at[:, lo:lo + T, :].add(out * conv_w[i, k])
        out = acc + conv_b[i]
    return out @ lin_w.T.astype(jnp.float32)


if __name__ == "__main__":
    # Module hyper-params
    nb_units_lstm = 32   # D (feature dim of x, contracted by the final linear)
    nb_channels = 6      # C (linear output dim)
    filter_width = 5
    dilation = 2
    B, T = 2, 8          # batch, sequence length

    key = jax.random.PRNGKey(0)
    kx, kw, kb, kl = jax.random.split(key, 4)

    # Deterministic synthetic parameters (shapes match the PyTorch module).
    x = jax.random.normal(kx, (B, T, nb_units_lstm), jnp.float32)
    conv_w = 0.3 * jax.random.normal(kw, (4, filter_width), jnp.float32)  # 4 convs, (1,1,fw,1) each
    conv_b = 0.1 * jax.random.normal(kb, (4,), jnp.float32)               # one bias per conv
    lin_w = jax.random.normal(kl, (nb_channels, nb_units_lstm), jnp.float32) / jnp.sqrt(nb_units_lstm)

    out = reg_block_ncnn(x, conv_w, conv_b, lin_w,
                         filter_width=filter_width, dilation=dilation)
    out = jax.block_until_ready(out)

    ref = reference(x, conv_w, conv_b, lin_w,
                    filter_width=filter_width, dilation=dilation)

    expected_T = T + 4 * dilation * (filter_width - 1)
    assert out.shape == (B, expected_T, nb_channels), out.shape
    assert jnp.allclose(out, ref, atol=1e-4, rtol=1e-4), \
        float(jnp.max(jnp.abs(out - ref)))

    print("KERNEL_OK")
</pallas_src>

<mosaic_0001>
module attributes {stable_mosaic.version = 11 : i64} {
  func.func @_kernel(%arg0: i32, %arg1: memref<1x8x32xf32, #tpu.memory_space<vmem>>, %arg2: memref<32x128xf32, #tpu.memory_space<vmem>>, %arg3: memref<40x8xf32, #tpu.memory_space<vmem>>, %arg4: memref<40x128xf32, #tpu.memory_space<vmem>>, %arg5: memref<1x40x128xf32, #tpu.memory_space<vmem>>) attributes {dimension_semantics = [#tpu.dimension_semantics<parallel>], iteration_bounds = array<i64: 2>, scalar_prefetch = 0 : i64, scratch_operands = 0 : i64, tpu.core_type = #tpu.core_type<tc>, window_params = [{transform_indices = @transform_0, window_bounds = array<i64: 1, 8, 32>}, {pipeline_mode = #tpu.pipeline_mode<synchronous>, transform_indices = @transform_1, window_bounds = array<i64: 32, 128>}, {pipeline_mode = #tpu.pipeline_mode<synchronous>, transform_indices = @transform_2, window_bounds = array<i64: 40, 8>}, {pipeline_mode = #tpu.pipeline_mode<synchronous>, transform_indices = @transform_3, window_bounds = array<i64: 40, 128>}, {transform_indices = @transform_4, window_bounds = array<i64: 1, 40, 128>}]} {
    %c0 = arith.constant 0 : index
    %c0_0 = arith.constant 0 : index
    %c0_1 = arith.constant 0 : index
    %0 = vector.load %arg1[%c0, %c0_0, %c0_1] : memref<1x8x32xf32, #tpu.memory_space<vmem>>, vector<1x8x32xf32>
    %1 = vector.shape_cast %0 : vector<1x8x32xf32> to vector<8x32xf32>
    %c0_2 = arith.constant 0 : index
    %c0_3 = arith.constant 0 : index
    %2 = vector.load %arg2[%c0_2, %c0_3] : memref<32x128xf32, #tpu.memory_space<vmem>>, vector<32x128xf32>
    %cst = arith.constant dense<0.000000e+00> : vector<8x128xf32>
    %3 = tpu.matmul %1, %2, %cst {dimension_numbers = #tpu.dot_dimension_numbers<[1], [0], [0], [1], [0, 0, 1, 1], [], []>} : vector<8x32xf32>, vector<32x128xf32>, vector<8x128xf32> -> vector<8x128xf32>
    %c0_4 = arith.constant 0 : index
    %c0_5 = arith.constant 0 : index
    %4 = vector.load %arg3[%c0_4, %c0_5] : memref<40x8xf32, #tpu.memory_space<vmem>>, vector<40x8xf32>
    %cst_6 = arith.constant dense<0.000000e+00> : vector<40x128xf32>
    %5 = tpu.matmul %4, %3, %cst_6 {dimension_numbers = #tpu.dot_dimension_numbers<[1], [0], [0], [1], [0, 0, 1, 1], [], []>} : vector<40x8xf32>, vector<8x128xf32>, vector<40x128xf32> -> vector<40x128xf32>
    %c0_7 = arith.constant 0 : index
    %c0_8 = arith.constant 0 : index
    %6 = vector.load %arg4[%c0_7, %c0_8] : memref<40x128xf32, #tpu.memory_space<vmem>>, vector<40x128xf32>
    %7 = arith.addf %5, %6 : vector<40x128xf32>
    %c0_9 = arith.constant 0 : index
    %c0_10 = arith.constant 0 : index
    %c0_11 = arith.constant 0 : index
    %8 = vector.load %arg5[%c0_9, %c0_10, %c0_11] : memref<1x40x128xf32, #tpu.memory_space<vmem>>, vector<1x40x128xf32>
    %9 = vector.shape_cast %8 : vector<1x40x128xf32> to vector<40x128xf32>
    %10 = vector.shape_cast %7 : vector<40x128xf32> to vector<1x40x128xf32>
    tpu.vector_store %arg5[%c0_9, %c0_10, %c0_11], %10 {strides = array<i32>} : memref<1x40x128xf32, #tpu.memory_space<vmem>>, vector<1x40x128xf32>,
    return
  }
  func.func @transform_0(%arg0: i32) -> (i32, i32, i32) {
    %c0_i32 = arith.constant 0 : i32
    %c0_i32_0 = arith.constant 0 : i32
    %c0_i32_1 = arith.constant 0 : i32
    return %arg0, %c0_i32, %c0_i32_0 : i32, i32, i32
  }
  func.func @transform_1(%arg0: i32) -> (i32, i32) {
    %c0_i32 = arith.constant 0 : i32
    %c0_i32_0 = arith.constant 0 : i32
    %c0_i32_1 = arith.constant 0 : i32
    return %c0_i32, %c0_i32_0 : i32, i32
  }
  func.func @transform_2(%arg0: i32) -> (i32, i32) {
    %c0_i32 = arith.constant 0 : i32
    %c0_i32_0 = arith.constant 0 : i32
    %c0_i32_1 = arith.constant 0 : i32
    return %c0_i32, %c0_i32_0 : i32, i32
  }
  func.func @transform_3(%arg0: i32) -> (i32, i32) {
    %c0_i32 = arith.constant 0 : i32
    %c0_i32_0 = arith.constant 0 : i32
    %c0_i32_1 = arith.constant 0 : i32
    return %c0_i32, %c0_i32_0 : i32, i32
  }
  func.func @transform_4(%arg0: i32) -> (i32, i32, i32) {
    %c0_i32 = arith.constant 0 : i32
    %c0_i32_0 = arith.constant 0 : i32
    %c0_i32_1 = arith.constant 0 : i32
    return %arg0, %c0_i32, %c0_i32_0 : i32, i32, i32
  }
}

</mosaic_0001>

<llo_original>
// kernel: tpu_custom_call.1
$region0: #{tpu_custom_call.1}
  #allocation0 [shape = 'u32[]', space=smem, size = 0x4, offset = 0x4, fixed_abs, tag = 'smem constant byte address 0x4 - core index']
  #allocation1 [shape = 'u32[144,128]{1,0:T(1,128)}', space=vmem, size = 0x12000, scoped, tag = 'internal scratch']
  %s0 = inlined_call_operand.hbm [shape: f32[2,8,32], index: 0, kind: input, shape index: {}]
  %s1 = inlined_call_operand.hbm [shape: f32[32,128], index: 1, kind: input, shape index: {}]
  %s2 = inlined_call_operand.vmem [shape: f32[40,8], index: 2, kind: input, shape index: {}]
  %s3 = inlined_call_operand.vmem [shape: f32[40,128], index: 3, kind: input, shape index: {}]
  %s4 = inlined_call_operand.hbm [shape: f32[2,40,128], index: 4, kind: output, shape index: {}]
  %s5 = sld [smem:[#allocation0]]
  $region57: #{tpu_custom_call.1} parent=0
    _
  %s7 = ssub.s32 1, %s5
  %s8 = scalar_select 0, %s7, %s5
  $region1: #{tpu_custom_call.1} parent=0
    #allocation2 [shape = 'u8[8192]{0}', space=vmem, size = 0x2000, scoped, tag = 'input window, operand 0']
    #allocation3 [shape = 's32[2]{0}', space=sflag, size = 0x8, scoped, tag = 'scoped memory for tpu_custom_call.1']
    #allocation4 [shape = 's32[2]{0}', space=sflag, size = 0x8, scoped, tag = 'scoped memory for tpu_custom_call.1']
    #allocation5 [shape = 'u8[16384]{0}', space=vmem, size = 0x4000, scoped, tag = 'input window, operand 1, single buffered']
    #allocation6 [shape = 's32[1]{0}', space=sflag, size = 0x4, scoped, tag = 'scoped memory for tpu_custom_call.1']
    #allocation7 [shape = 'u8[40960]{0}', space=vmem, size = 0xa000, scoped, tag = 'output window, operand 0']
    %9 = vsyncpa [#allocation3], 0
    %s10 = scalar_lea.sflag [#allocation3], 1
    %11 = vsyncpa %s10, 0
    %12 = vsyncpa [#allocation6], 0
    %13 = vsyncpa [#allocation4], 0
    %s14 = scalar_lea.sflag [#allocation4], 1
    %15 = vsyncpa %s14, 0
    loop: start=0, step=1, limit=4
    $region2: #{tpu_custom_call.1} parent=1 // loop_pre_header
      _
    $region3: #{tpu_custom_call.1} parent=1 // loop_header
      %s17 = sphi 0, %s21
      %p18 = scmp.ge.s32.totalorder %s17, 4
      %s27 = sphi 0, %s29
      %s30 = sphi 0, %s27
      %s31 = sphi 0, %s30
      %s47 = sphi 0, %s31
      %s51 = sphi 0, %s51
      %s53 = sphi 0, %s51
      %s54 = sphi 0, %s53
      %s68 = sphi 0, %s54
      %s72 = sphi 0, %s72
      %s74 = sphi 0, %s72
      %s75 = sphi 0, %s74
      %s89 = sphi 0, %s75
      %s93 = sphi 0, %s93
      %s95 = sphi 0, %s93
      %s96 = sphi 0, %s95
      %s110 = sphi 0, %s96
      %s116 = sphi 0, %s118
      %s119 = sphi 0, %s116
      %s120 = sphi 0, %s119
      %s136 = sphi 0, %s120
    $region4: #{tpu_custom_call.1} parent=1 // loop_header_branch
      %20 = sbr.rel (%p18) target = $region8
    $region5: #{tpu_custom_call.1} parent=1 // loop_body
      %s22 = ssub.s32 %s17, 1
      %s23 = ssub.s32 %s17, 2
      %s24 = sadd.s32 %s17, 1
      %s25 = ssub.s32 %s17, %s24
      %p26 = scmp.eq.s32.totalorder %s25, 0
      %s28 = sadd.s32 %s27, 1
      %s29 = scalar_select %p26, %s27, %s28
      %p32 = pneg %p26
      %p33 = scmp.eq.s32.totalorder %s17, 1
      %p34 = por %p32, %p33
      %p35 = scmp.ne.s32.totalorder %s27, %s30
      %p36 = scmp.eq.s32.totalorder %s17, 0
      %p37 = por %p35, %p36
      %p38 = scmp.ne.s32.totalorder %s27, %s30
      %p39 = scmp.eq.s32.totalorder %s22, 1
      %p40 = por %p38, %p39
      %p41 = scmp.ne.s32.totalorder %s30, %s31
      %p42 = scmp.eq.s32.totalorder %s22, 0
      %p43 = por %p41, %p42
      %p44 = scmp.ne.s32.totalorder %s30, %s31
      %p45 = scmp.eq.s32.totalorder %s23, 1
      %p46 = por %p44, %p45
      %p48 = scmp.ne.s32.totalorder %s31, %s47
      %p49 = scmp.eq.s32.totalorder %s23, 0
      %p50 = por %p48, %p49
      %s52 = sadd.s32 %s51, 1
      %p55 = scmp.eq.s32.totalorder %s17, 1
      %p56 = scmp.ne.s32.totalorder %s51, %s53
      %p57 = scmp.eq.s32.totalorder %s17, 0
      %p58 = por %p56, %p57
      %p59 = scmp.ne.s32.totalorder %s51, %s53
      %p60 = scmp.eq.s32.totalorder %s22, 1
      %p61 = por %p59, %p60
      %p62 = scmp.ne.s32.totalorder %s53, %s54
      %p63 = scmp.eq.s32.totalorder %s22, 0
      %p64 = por %p62, %p63
      %p65 = scmp.ne.s32.totalorder %s53, %s54
      %p66 = scmp.eq.s32.totalorder %s23, 1
      %p67 = por %p65, %p66
      %p69 = scmp.ne.s32.totalorder %s54, %s68
      %p70 = scmp.eq.s32.totalorder %s23, 0
      %p71 = por %p69, %p70
      %s73 = sadd.s32 %s72, 1
      %p76 = scmp.eq.s32.totalorder %s17, 1
      %p77 = scmp.ne.s32.totalorder %s72, %s74
      %p78 = scmp.eq.s32.totalorder %s17, 0
      %p79 = por %p77, %p78
      %p80 = scmp.ne.s32.totalorder %s72, %s74
      %p81 = scmp.eq.s32.totalorder %s22, 1
      %p82 = por %p80, %p81
      %p83 = scmp.ne.s32.totalorder %s74, %s75
      %p84 = scmp.eq.s32.totalorder %s22, 0
      %p85 = por %p83, %p84
      %p86 = scmp.ne.s32.totalorder %s74, %s75
      %p87 = scmp.eq.s32.totalorder %s23, 1
      %p88 = por %p86, %p87
      %p90 = scmp.ne.s32.totalorder %s75, %s89
      %p91 = scmp.eq.s32.totalorder %s23, 0
      %p92 = por %p90, %p91
      %s94 = sadd.s32 %s93, 1
      %p97 = scmp.eq.s32.totalorder %s17, 1
      %p98 = scmp.ne.s32.totalorder %s93, %s95
      %p99 = scmp.eq.s32.totalorder %s17, 0
      %p100 = por %p98, %p99
      %p101 = scmp.ne.s32.totalorder %s93, %s95
      %p102 = scmp.eq.s32.totalorder %s22, 1
      %p103 = por %p101, %p102
      %p104 = scmp.ne.s32.totalorder %s95, %s96
      %p105 = scmp.eq.s32.totalorder %s22, 0
      %p106 = por %p104, %p105
      %p107 = scmp.ne.s32.totalorder %s95, %s96
      %p108 = scmp.eq.s32.totalorder %s23, 1
      %p109 = por %p107, %p108
      %p111 = scmp.ne.s32.totalorder %s96, %s110
      %p112 = scmp.eq.s32.totalorder %s23, 0
      %p113 = por %p111, %p112
      %s114 = ssub.s32 %s17, %s24
      %p115 = scmp.eq.s32.totalorder %s114, 0
      %s117 = sadd.s32 %s116, 1
      %s118 = scalar_select %p115, %s116, %s117
      %p121 = pneg %p115
      %p122 = scmp.eq.s32.totalorder %s17, 1
      %p123 = por %p121, %p122
      %p124 = scmp.ne.s32.totalorder %s116, %s119
      %p125 = scmp.eq.s32.totalorder %s17, 0
      %p126 = por %p124, %p125
      %p127 = scmp.ne.s32.totalorder %s116, %s119
      %p128 = scmp.eq.s32.totalorder %s22, 1
      %p129 = por %p127, %p128
      %p130 = scmp.ne.s32.totalorder %s119, %s120
      %p131 = scmp.eq.s32.totalorder %s22, 0
      %p132 = por %p130, %p131
      %p133 = scmp.ne.s32.totalorder %s119, %s120
      %p134 = scmp.eq.s32.totalorder %s23, 1
      %p135 = por %p133, %p134
      %p137 = scmp.ne.s32.totalorder %s120, %s136
      %p138 = scmp.eq.s32.totalorder %s23, 0
      %p139 = por %p137, %p138
      %p140 = scmp.le.s32.totalorder 1, %s17
      %p141 = scmp.lt.s32.totalorder %s17, 3
      %p142 = pnand %p140, %p141
      %p143 = pneg %p142
      // Predicated region
      $region9: #{tpu_custom_call.1} parent=5 // pred_check
        _
      $region10: #{tpu_custom_call.1} parent=5 // pred_check_branch
        %145 = sbr.rel (%p142) target = $region12
      $region11: #{tpu_custom_call.1} parent=5 // pred_region
        %s146 = ssub.s32 %s17, 1
        // Predicated region
        $region13: #{tpu_custom_call.1} parent=11 // pred_check
          %p147 = pneg %p64
        $region14: #{tpu_custom_call.1} parent=11 // pred_check_branch
          %149 = sbr.rel (%p147) target = $region16
        $region15: #{tpu_custom_call.1} parent=11 // pred_region
          %s151 = ssub.s32 512, 512
          %152 = vsyncadd [#allocation6], %s151
          %s153 = sshll.u32 [#allocation5], 4
          %s154 = int_to_ptr.vmem [resolvable:$true] %s153
          %159 = dma.hbm_to_vmem [thread:$0]  %s1, 512, %s154, [#allocation6], 128, 128, 8
        $region16: #{tpu_custom_call.1} parent=11 // pred_fallthru
          _
        // Predicated region
        $region17: #{tpu_custom_call.1} parent=11 // pred_check
          %p160 = pneg %p85
        $region18: #{tpu_custom_call.1} parent=11 // pred_check_branch
          %162 = sbr.rel (%p160) target = $region20
        $region19: #{tpu_custom_call.1} parent=11 // pred_region
          _
        $region20: #{tpu_custom_call.1} parent=11 // pred_fallthru
          _
        // Predicated region
        $region21: #{tpu_custom_call.1} parent=11 // pred_check
          %p163 = pneg %p106
        $region22: #{tpu_custom_call.1} parent=11 // pred_check_branch
          %165 = sbr.rel (%p163) target = $region24
        $region23: #{tpu_custom_call.1} parent=11 // pred_region
          _
        $region24: #{tpu_custom_call.1} parent=11 // pred_fallthru
          _
      $region12: #{tpu_custom_call.1} parent=5 // pred_fallthru
        _
      %p166 = scmp.lt.s32.totalorder %s17, 2
      // Predicated region
      $region25: #{tpu_custom_call.1} parent=5 // pred_check
        %p167 = pneg %p166
      $region26: #{tpu_custom_call.1} parent=5 // pred_check_branch
        %169 = sbr.rel (%p167) target = $region28
      $region27: #{tpu_custom_call.1} parent=5 // pred_region
        // Predicated region
        $region29: #{tpu_custom_call.1} parent=27 // pred_check
          %p170 = pneg %p37
        $region30: #{tpu_custom_call.1} parent=27 // pred_check_branch
          %172 = sbr.rel (%p170) target = $region32
        $region31: #{tpu_custom_call.1} parent=27 // pred_region
          %s173 = sand.u32 %s27, 1
          %s174 = scalar_lea.sflag [#allocation3], %s173
          %s175 = sand.u32 %s27, 1
          %s176 = smul.addr %s175, 8
          %s177 = scalar_lea.vmem [#allocation2], %s176
          %s179 = ssub.s32 128, 128
          %180 = vsyncadd %s174, %s179
          %s181 = smul.addr %s17, 128
          %s182 = scalar_lea.hbm %s0, %s181
          %s184 = sshll.u32 %s177, 4
          %s185 = int_to_ptr.vmem [resolvable:$true] %s184
          %187 = dma.hbm_to_vmem [thread:$0]  %s182, 128, %s185, %s174
        $region32: #{tpu_custom_call.1} parent=27 // pred_fallthru
          _
      $region28: #{tpu_custom_call.1} parent=5 // pred_fallthru
        _
      %p188 = scmp.le.s32.totalorder 1, %s17
      %p189 = scmp.lt.s32.totalorder %s17, 3
      %p190 = pnand %p188, %p189
      %p191 = pneg %p190
      // Predicated region
      $region33: #{tpu_custom_call.1} parent=5 // pred_check
        _
      $region34: #{tpu_custom_call.1} parent=5 // pred_check_branch
        %193 = sbr.rel (%p190) target = $region36
      $region35: #{tpu_custom_call.1} parent=5 // pred_region
        %s194 = ssub.s32 %s17, 1
        %s195 = sand.u32 %s30, 1
        %s196 = scalar_lea.sflag [#allocation3], %s195
        %s197 = sand.u32 %s30, 1
        %s198 = smul.addr %s197, 8
        %s199 = scalar_lea.vmem [#allocation2], %s198
        // Predicated region
        $region37: #{tpu_custom_call.1} parent=35 // pred_check
          %p200 = pneg %p43
        $region38: #{tpu_custom_call.1} parent=35 // pred_check_branch
          %202 = sbr.rel (%p200) target = $region40
        $region39: #{tpu_custom_call.1} parent=35 // pred_region
          %203 = dma.done %s196, 128
        $region40: #{tpu_custom_call.1} parent=35 // pred_fallthru
          _
        // Predicated region
        $region41: #{tpu_custom_call.1} parent=35 // pred_check
          %p204 = pneg %p64
        $region42: #{tpu_custom_call.1} parent=35 // pred_check_branch
          %206 = sbr.rel (%p204) target = $region44
        $region43: #{tpu_custom_call.1} parent=35 // pred_region
          %207 = dma.done [#allocation6], 512
        $region44: #{tpu_custom_call.1} parent=35 // pred_fallthru
          _
        %s208 = sand.u32 %s30, 1
        %s209 = scalar_lea.sflag [#allocation3], %s208
        %s210 = sand.u32 %s30, 1
        %s211 = smul.addr %s210, 8
        %s212 = scalar_lea.vmem [#allocation2], %s211
        %p213 = pneg %p43
        %p214 = pneg %p40
        %p215 = pneg %p64
        %p216 = pneg %p61
        %p217 = pneg %p85
        %p218 = pneg %p82
        %p219 = pneg %p106
        %p220 = pneg %p103
        %p221 = pneg %p132
        %p222 = pneg %p129
        %s223 = sand.u32 %s119, 1
        %s224 = scalar_lea.sflag [#allocation4], %s223
        %s225 = sand.u32 %s119, 1
        %s226 = smul.addr %s225, 40
        %s227 = scalar_lea.vmem [#allocation7], %s226
        %v228 = vld [vmem:[%s199] sm:$0xff]
        %v229 = vld [vmem:[#allocation5] sm:$0xff]
        %v230 = vld [vmem:[#allocation5 + $0x8] sm:$0xff]
        %v231 = vld [vmem:[#allocation5 + $0x10] sm:$0xff]
        %v232 = vld [vmem:[#allocation5 + $0x18] sm:$0xff]
        %vm233 = vcmask 261120
        %v235 = vsel %vm233, %v228, 0
        %237 = vmatprep.subr.mxu0 0.0
        %238 = vmatpush1.msra.mxu0 0.0
        %239 = vmatprep.subr.mxu0 0.0
        %240 = vmatpush1.msra.mxu0 0.0
        %241 = vmatprep.subr.mxu0 0.0
        %242 = vmatpush1.msra.mxu0 0.0
        %243 = vmatprep.subr.mxu0 0.0
        %244 = vmatpush1.msra.mxu0 0.0
        %245 = vmatprep.subr.mxu0 0.0
        %246 = vmatpush1.msra.mxu0 0.0
        %247 = vmatprep.subr.mxu0 0.0
        %248 = vmatpush1.msra.mxu0 0.0
        %249 = vmatprep.subr.mxu0 0.0
        %250 = vmatpush1.msra.mxu0 0.0
        %251 = vmatprep.subr.mxu0 0.0
        %252 = vmatpush1.msra.mxu0 0.0
        %253 = vmatprep.subr.mxu0 0.0
        %254 = vmatpush1.msra.mxu0 0.0
        %255 = vmatprep.subr.mxu0 0.0
        %256 = vmatpush1.msra.mxu0 0.0
        %257 = vmatprep.subr.mxu0 0.0
        %258 = vmatpush1.msra.mxu0 0.0
        %259 = vmatprep.subr.mxu0 0.0
        %260 = vmatpush1.msra.mxu0 0.0
        %261 = vmatprep.subr.mxu0 0.0
        %262 = vmatpush1.msra.mxu0 %v232
        %263 = vmatprep.subr.mxu0 0.0
        %264 = vmatpush1.msra.mxu0 %v231
        %265 = vmatprep.subr.mxu0 0.0
        %266 = vmatpush1.msra.mxu0 %v230
        %267 = vmatprep.subr.mxu0 0.0
        %268 = vmatpush1.msra.mxu0 %v229
        %269 = vmatprep.subr.mxu0 0.0
        %270 = vmatpush2.msra.mxu0 0.0
        %271 = vmatprep.subr.mxu0 0.0
        %272 = vmatpush2.msra.mxu0 0.0
        %273 = vmatprep.subr.mxu0 0.0
        %274 = vmatpush2.msra.mxu0 0.0
        %275 = vmatprep.subr.mxu0 0.0
        %276 = vmatpush2.msra.mxu0 0.0
        %277 = vmatprep.subr.mxu0 0.0
        %278 = vmatpush2.msra.mxu0 0.0
        %279 = vmatprep.subr.mxu0 0.0
        %280 = vmatpush2.msra.mxu0 0.0
        %281 = vmatprep.subr.mxu0 0.0
        %282 = vmatpush2.msra.mxu0 0.0
        %283 = vmatprep.subr.mxu0 0.0
        %284 = vmatpush2.msra.mxu0 0.0
        %285 = vmatprep.subr.mxu0 0.0
        %286 = vmatpush2.msra.mxu0 0.0
        %287 = vmatprep.subr.mxu0 0.0
        %288 = vmatpush2.msra.mxu0 0.0
        %289 = vmatprep.subr.mxu0 0.0
        %290 = vmatpush2.msra.mxu0 0.0
        %291 = vmatprep.subr.mxu0 0.0
        %292 = vmatpush2.msra.mxu0 0.0
        %293 = vmatprep.subr.mxu0 0.0
        %294 = vmatpush2.msra.mxu0 0.0
        %295 = vmatprep.subr.mxu0 0.0
        %296 = vmatpush2.msra.mxu0 0.0
        %297 = vmatprep.subr.mxu0 0.0
        %298 = vmatpush2.msra.mxu0 0.0
        %299 = vmatprep.subr.mxu0 0.0
        %300 = vmatpush2.msra.mxu0 0.0
        %301 = vmatprep.mubr.f32.mxu0 0.0
        %302 = vmatmul.mubr.f32.gmra.mxu0 %v235
        %v303 = vpop.f32.mrf.mxu0
        %v304 = vadd.f32 0.0, %v303
        %v305 = vpop.f32.mrf.mxu0
        %306 = vdwg.mxu0
        %v307 = vld [vmem:[%s2] sm:$0xff]
        %v308 = vld [vmem:[%s2 + $0x8] sm:$0xff]
        %v309 = vld [vmem:[%s2 + $0x10] sm:$0xff]
        %v310 = vld [vmem:[%s2 + $0x18] sm:$0xff]
        %v311 = vld [vmem:[%s2 + $0x20] sm:$0xff]
        %v312 = vld [vmem:[%s3] sm:$0xff]
        %v313 = vld [vmem:[%s3 + $0x8] sm:$0xff]
        %v314 = vld [vmem:[%s3 + $0x10] sm:$0xff]
        %v315 = vld [vmem:[%s3 + $0x18] sm:$0xff]
        %v316 = vld [vmem:[%s3 + $0x20] sm:$0xff]
        %vm317 = vcmask 64512
        %v319 = vsel %vm317, %v307, 0
        %v322 = vsel %vm317, %v308, 0
        %v325 = vsel %vm317, %v309, 0
        %v328 = vsel %vm317, %v310, 0
        %v331 = vsel %vm317, %v311, 0
        %333 = vmatprep.subr.mxu0 0.0
        %334 = vmatpush1.msra.mxu0 0.0
        %335 = vmatprep.subr.mxu0 0.0
        %336 = vmatpush1.msra.mxu0 0.0
        %337 = vmatprep.subr.mxu0 0.0
        %338 = vmatpush1.msra.mxu0 0.0
        %339 = vmatprep.subr.mxu0 0.0
        %340 = vmatpush1.msra.mxu0 0.0
        %341 = vmatprep.subr.mxu0 0.0
        %342 = vmatpush1.msra.mxu0 0.0
        %343 = vmatprep.subr.mxu0 0.0
        %344 = vmatpush1.msra.mxu0 0.0
        %345 = vmatprep.subr.mxu0 0.0
        %346 = vmatpush1.msra.mxu0 0.0
        %347 = vmatprep.subr.mxu0 0.0
        %348 = vmatpush1.msra.mxu0 0.0
        %349 = vmatprep.subr.mxu0 0.0
        %350 = vmatpush1.msra.mxu0 0.0
        %351 = vmatprep.subr.mxu0 0.0
        %352 = vmatpush1.msra.mxu0 0.0
        %353 = vmatprep.subr.mxu0 0.0
        %354 = vmatpush1.msra.mxu0 0.0
        %355 = vmatprep.subr.mxu0 0.0
        %356 = vmatpush1.msra.mxu0 0.0
        %357 = vmatprep.subr.mxu0 0.0
        %358 = vmatpush1.msra.mxu0 0.0
        %359 = vmatprep.subr.mxu0 0.0
        %360 = vmatpush1.msra.mxu0 0.0
        %361 = vmatprep.subr.mxu0 0.0
        %362 = vmatpush1.msra.mxu0 0.0
        %363 = vmatprep.subr.mxu0 0.0
        %364 = vmatpush1.msra.mxu0 %v304
        %365 = vmatprep.subr.mxu0 0.0
        %366 = vmatpush2.msra.mxu0 0.0
        %367 = vmatprep.subr.mxu0 0.0
        %368 = vmatpush2.msra.mxu0 0.0
        %369 = vmatprep.subr.mxu0 0.0
        %370 = vmatpush2.msra.mxu0 0.0
        %371 = vmatprep.subr.mxu0 0.0
        %372 = vmatpush2.msra.mxu0 0.0
        %373 = vmatprep.subr.mxu0 0.0
        %374 = vmatpush2.msra.mxu0 0.0
        %375 = vmatprep.subr.mxu0 0.0
        %376 = vmatpush2.msra.mxu0 0.0
        %377 = vmatprep.subr.mxu0 0.0
        %378 = vmatpush2.msra.mxu0 0.0
        %379 = vmatprep.subr.mxu0 0.0
        %380 = vmatpush2.msra.mxu0 0.0
        %381 = vmatprep.subr.mxu0 0.0
        %382 = vmatpush2.msra.mxu0 0.0
        %383 = vmatprep.subr.mxu0 0.0
        %384 = vmatpush2.msra.mxu0 0.0
        %385 = vmatprep.subr.mxu0 0.0
        %386 = vmatpush2.msra.mxu0 0.0
        %387 = vmatprep.subr.mxu0 0.0
        %388 = vmatpush2.msra.mxu0 0.0
        %389 = vmatprep.subr.mxu0 0.0
        %390 = vmatpush2.msra.mxu0 0.0
        %391 = vmatprep.subr.mxu0 0.0
        %392 = vmatpush2.msra.mxu0 0.0
        %393 = vmatprep.subr.mxu0 0.0
        %394 = vmatpush2.msra.mxu0 0.0
        %395 = vmatprep.subr.mxu0 0.0
        %396 = vmatpush2.msra.mxu0 0.0
        %397 = vmatprep.mubr.f32.mxu0 0.0
        %398 = vmatmul.mubr.f32.gmra.mxu0 %v319
        %v399 = vpop.f32.mrf.mxu0
        %v400 = vadd.f32 %v312, %v399
        %v401 = vpop.f32.mrf.mxu0
        %402 = vmatprep.mubr.f32.mxu0 0.0
        %403 = vmatmul.mubr.f32.gmra.mxu0 %v322
        %v404 = vpop.f32.mrf.mxu0
        %v405 = vadd.f32 %v313, %v404
        %v406 = vpop.f32.mrf.mxu0
        %407 = vmatprep.mubr.f32.mxu0 0.0
        %408 = vmatmul.mubr.f32.gmra.mxu0 %v325
        %v409 = vpop.f32.mrf.mxu0
        %v410 = vadd.f32 %v314, %v409
        %v411 = vpop.f32.mrf.mxu0
        %412 = vmatprep.mubr.f32.mxu0 0.0
        %413 = vmatmul.mubr.f32.gmra.mxu0 %v328
        %v414 = vpop.f32.mrf.mxu0
        %v415 = vadd.f32 %v315, %v414
        %v416 = vpop.f32.mrf.mxu0
        %417 = vmatprep.mubr.f32.mxu0 0.0
        %418 = vmatmul.mubr.f32.gmra.mxu0 %v331
        %v419 = vpop.f32.mrf.mxu0
        %v420 = vadd.f32 %v316, %v419
        %v421 = vpop.f32.mrf.mxu0
        %422 = vdwg.mxu0
        %423 = vst [vmem:[%s227] sm:$0xff] %v400
        %424 = vst [vmem:[%s227 + $0x8] sm:$0xff] %v405
        %425 = vst [vmem:[%s227 + $0x10] sm:$0xff] %v410
        %426 = vst [vmem:[%s227 + $0x18] sm:$0xff] %v415
        %427 = vst [vmem:[%s227 + $0x20] sm:$0xff] %v420
        %s428 = sand.u32 %s119, 1
        %s429 = scalar_lea.sflag [#allocation4], %s428
        %s430 = sand.u32 %s119, 1
        %s431 = smul.addr %s430, 40
        %s432 = scalar_lea.vmem [#allocation7], %s431
        // Predicated region
        $region45: #{tpu_custom_call.1} parent=35 // pred_check
          %p433 = pneg %p129
        $region46: #{tpu_custom_call.1} parent=35 // pred_check_branch
          %435 = sbr.rel (%p433) target = $region48
        $region47: #{tpu_custom_call.1} parent=35 // pred_region
          %s437 = ssub.s32 640, 640
          %438 = vsyncadd %s429, %s437
          %s439 = smul.addr %s22, 5
          %s440 = smul.addr %s439, 128
          %s441 = scalar_lea.hbm %s4, %s440
          %s442 = sshll.u32 %s432, 4
          %s443 = int_to_ptr.vmem [resolvable:$true] %s442
          %448 = dma.vmem_to_hbm [thread:$0]  %s443, 640, %s441, %s429, 128, 128, 8
        $region48: #{tpu_custom_call.1} parent=35 // pred_fallthru
          _
      $region36: #{tpu_custom_call.1} parent=5 // pred_fallthru
        _
      %p449 = scmp.le.s32.totalorder 2, %s17
      // Predicated region
      $region49: #{tpu_custom_call.1} parent=5 // pred_check
        %p450 = pneg %p449
      $region50: #{tpu_custom_call.1} parent=5 // pred_check_branch
        %452 = sbr.rel (%p450) target = $region52
      $region51: #{tpu_custom_call.1} parent=5 // pred_region
        %s453 = ssub.s32 %s17, 2
        // Predicated region
        $region53: #{tpu_custom_call.1} parent=51 // pred_check
          %p454 = pneg %p135
        $region54: #{tpu_custom_call.1} parent=51 // pred_check_branch
          %456 = sbr.rel (%p454) target = $region56
        $region55: #{tpu_custom_call.1} parent=51 // pred_region
          %s457 = sand.u32 %s120, 1
          %s458 = scalar_lea.sflag [#allocation4], %s457
          %s459 = sand.u32 %s120, 1
          %s460 = smul.addr %s459, 40
          %s461 = scalar_lea.vmem [#allocation7], %s460
          %462 = dma.done %s458, 640
        $region56: #{tpu_custom_call.1} parent=51 // pred_fallthru
          _
      $region52: #{tpu_custom_call.1} parent=5 // pred_fallthru
        _
    $region6: #{tpu_custom_call.1} parent=1 // loop_footer
      %s21 = sadd.s32 1, %s17
    $region7: #{tpu_custom_call.1} parent=1 // loop_footer_branch
      %16 = sbr.rel target = $region3
    $region8: #{tpu_custom_call.1} parent=1 // loop_exit
      _
    %463 = vsyncpa [#allocation3], 1
    %s464 = scalar_lea.sflag [#allocation3], 1
    %465 = vsyncpa %s464, 1
    %466 = vsyncpa [#allocation6], 1
    %467 = vsyncpa [#allocation4], 1
    %s468 = scalar_lea.sflag [#allocation4], 1
    %469 = vsyncpa %s468, 1

</llo_original>
